<compile_context>
chip_gen: v7x
topology: tpu7x:2x2x1
jax: 0.10.0
libtpu: 0.0.40
codegen_flags: <defaults>
</compile_context>

<pallas_src>
import functools

import jax
import jax.numpy as jnp
from jax.experimental import pallas as pl
from jax.experimental.pallas import tpu as pltpu

EPS = 1e-5                    # PyTorch InstanceNorm2d default eps
MXU_DTYPE = jnp.bfloat16      # MXU operand dtype (accumulation stays f32)
ACT_DTYPE = jnp.bfloat16      # inter-layer activation dtype in HBM
MARGIN = 3                    # universal spatial zero margin (covers K <= 7)


def _rnd(v, m):
    return ((v + m - 1) // m) * m


# ----------------------------------------------------------------------------
# pltpu.roll convention probe: we need out[m] = in[m + d]  <=>  shift = SIGN*d.
# (jnp.roll convention => SIGN = -1.)  Probed once, eagerly, on the device.
# ----------------------------------------------------------------------------
def _probe_roll_sign():
    def k(x_ref, o_ref):
        o_ref[...] = pltpu.roll(x_ref[...], shift=1, axis=1)

    x = jnp.tile(jnp.arange(128, dtype=jnp.float32)[None, :], (8, 1))
    r = pl.pallas_call(k, out_shape=jax.ShapeDtypeStruct((8, 128),
                                                         jnp.float32))(x)
    first = float(jax.device_get(r)[0, 0])
    return -1 if first == 127.0 else 1


_ROLL_SIGN = _probe_roll_sign()


_VMEM_LIMIT = None


def _vmem_limit_bytes():
    """Per-generation VMEM budget (leave headroom for buffering / compiler)."""
    global _VMEM_LIMIT
    if _VMEM_LIMIT is None:
        cap = None
        try:
            info = pltpu.get_tpu_info()
            cap = getattr(info, "vmem_capacity_bytes", None)
        except Exception:
            cap = None
        if cap is None:
            cap = 64 * 1024 * 1024        # conservative: assume smallest (v7x)
        _VMEM_LIMIT = int(cap) * 3 // 4
    return _VMEM_LIMIT


# ----------------------------------------------------------------------------
# The fused kernel: aligned tap gather -> VMEM slab -> one full-depth GEMM ->
# masked InstanceNorm stats -> in-place affine + ReLU (+residual) -> bf16 store.
# One grid step = one image.
# ----------------------------------------------------------------------------
def _fused_kernel(*refs, n_src, src_offsets, ctot, taps, wp, l_span, m_rows,
                  c16out, n_rep, row_ofs, l_total, relu, has_residual,
                  inv_count):
    srcs = refs[:n_src]
    w_ref, g_ref, b_ref, m_ref = refs[n_src:n_src + 4]
    idx = n_src + 4
    res_ref = None
    if has_residual:
        res_ref = refs[idx]
        idx += 1
    o_ref, slab_ref, acc_ref = refs[idx], refs[idx + 1], refs[idx + 2]

    # --- gather taps into the persistent bf16 slab -------------------------
    # row offsets are multiples of wp (lane aligned); the small column shift is
    # a lane rotation (XLU); sublane destinations are 16-aligned.
    for t, (row0, dcol) in enumerate(taps):
        base = t * ctot
        for s in range(n_src):
            sl = srcs[s][0, :, row0 * wp:row0 * wp + l_span]
            if dcol != 0:
                sl = pltpu.roll(sl, shift=(_ROLL_SIGN * dcol) % l_span, axis=1)
            c_s = srcs[s].shape[1]
            off = base + src_offsets[s]
            slab_ref[off:off + c_s, :] = sl

    # --- one full-depth GEMM on the MXU (bf16 x bf16 -> f32 accumulate) ----
    acc_ref[...] = jnp.dot(w_ref[...], slab_ref[...],
                           preferred_element_type=jnp.float32)

    # --- InstanceNorm2d stats over valid columns (all phase groups) --------
    mask = m_ref[...]                               # (1, l_span) f32
    acc = acc_ref[...]                              # (m_rows, l_span) f32
    am = acc * mask
    s1 = jnp.sum(am, axis=1, keepdims=True)         # (m_rows, 1)
    s2 = jnp.sum(am * acc, axis=1, keepdims=True)
    if n_rep > 1:                                   # combine sub-pixel phases
        s1 = sum(s1[r * c16out:(r + 1) * c16out] for r in range(n_rep))
        s2 = sum(s2[r * c16out:(r + 1) * c16out] for r in range(n_rep))
    mean = s1 * inv_count
    # TODO(synk): use two-pass / compensated variance once spatial tiling is
    #             added for 256x256 inputs (precision of E[x^2]-E[x]^2).
    var = jnp.maximum(s2 * inv_count - mean * mean, 0.0)
    inv_std = jax.lax.rsqrt(var + EPS)
    scale = g_ref[...] * inv_std                    # (c16out, 1) f32
    shift = b_ref[...] - mean * scale
    if n_rep > 1:
        scale = jnp.concatenate([scale] * n_rep, axis=0)
        shift = jnp.concatenate([shift] * n_rep, axis=0)

    # --- normalize in place + ReLU + pad-column mask + residual + store ----
    y = acc * scale + shift
    if relu:
        y = jnp.maximum(y, 0.0)
    y = y * mask                                    # keep canonical zero margins
    if has_residual:
        y = y + res_ref[0, :, row_ofs * wp:row_ofs * wp + l_span].astype(
            jnp.float32)

    start = row_ofs * wp
    if start > 0:
        o_ref[0, :, 0:start] = jnp.zeros((m_rows, start), o_ref.dtype)
    o_ref[0, :, start:start + l_span] = y.astype(o_ref.dtype)
    if start + l_span < l_total:
        o_ref[0, :, start + l_span:l_total] = jnp.zeros(
            (m_rows, l_total - start - l_span), o_ref.dtype)


def _fused_call(sources, w_flat, gamma, beta, *, taps, wp, h_span, w_valid,
                n_rep, c16out, row_ofs, out_rows, relu, residual, count):
    """All sources share the lane-padded row width `wp` (multiple of 128).

    Returns (N, n_rep*c16out, out_rows*wp) bf16; rows [row_ofs, row_ofs+h_span)
    carry data, every other row / invalid column / pad channel is exactly 0."""
    N = sources[0].shape[0]
    l_span = h_span * wp
    l_total = out_rows * wp
    m_rows = n_rep * c16out

    src_offsets, off = [], 0
    for s in sources:
        src_offsets.append(off)
        off += s.shape[1]
    ctot = off
    tdepth = len(taps) * ctot
    assert w_flat.shape == (m_rows, tdepth), (w_flat.shape, m_rows, tdepth)
    if residual is not None:
        assert residual.shape[1] == m_rows and residual.shape[2] == l_total

    col = jnp.arange(l_span, dtype=jnp.int32) % wp
    mask = ((col >= MARGIN) & (col < MARGIN + w_valid)).astype(jnp.float32)
    mask = mask.reshape(1, l_span)

    kernel = functools.partial(
        _fused_kernel, n_src=len(sources), src_offsets=tuple(src_offsets),
        ctot=ctot, taps=tuple(taps), wp=wp, l_span=l_span, m_rows=m_rows,
        c16out=c16out, n_rep=n_rep, row_ofs=row_ofs, l_total=l_total,
        relu=relu, has_residual=residual is not None,
        inv_count=1.0 / float(count))

    in_specs, args = [], []
    for s in sources:
        in_specs.append(pl.BlockSpec((1, s.shape[1], s.shape[2]),
                                     lambda n: (n, 0, 0)))
        args.append(s)
    in_specs += [pl.BlockSpec((m_rows, tdepth), lambda n: (0, 0)),
                 pl.BlockSpec((c16out, 1), lambda n: (0, 0)),
                 pl.BlockSpec((c16out, 1), lambda n: (0, 0)),
                 pl.BlockSpec((1, l_span), lambda n: (0, 0))]
    args += [w_flat, gamma, beta, mask]
    if residual is not None:
        in_specs.append(pl.BlockSpec((1, residual.shape[1], residual.shape[2]),
                                     lambda n: (n, 0, 0)))
        args.append(residual)

    return pl.pallas_call(
        kernel,
        out_shape=jax.ShapeDtypeStruct((N, m_rows, l_total), ACT_DTYPE),
        grid=(N,),
        in_specs=in_specs,
        out_specs=pl.BlockSpec((1, m_rows, l_total), lambda n: (n, 0, 0)),
        scratch_shapes=[pltpu.VMEM((tdepth, l_span), MXU_DTYPE),
                        pltpu.VMEM((m_rows, l_span), jnp.float32)],
        compiler_params=pltpu.CompilerParams(
            dimension_semantics=("parallel",),
            vmem_limit_bytes=_vmem_limit_bytes()),
    )(*args)


# ----------------------------------------------------------------------------
# Canonical activation format helpers.
# ----------------------------------------------------------------------------
def _canonical_spec(h, w, c):
    return _rnd(c, 16), h + 2 * MARGIN, _rnd(w + 2 * MARGIN, 128)


def to_canonical(x_nchw):
    n, c, h, w = x_nchw.shape
    c16, hu, wpu = _canonical_spec(h, w, c)
    x = jnp.pad(x_nchw, ((0, 0), (0, c16 - c), (MARGIN, MARGIN),
                         (MARGIN, wpu - MARGIN - w)))
    return x.reshape(n, c16, hu * wpu).astype(ACT_DTYPE)


def from_canonical(xc, c, h, w):
    n = xc.shape[0]
    c16, hu, wpu = _canonical_spec(h, w, c)
    x = xc.reshape(n, c16, hu, wpu)
    return x[:, :c, MARGIN:MARGIN + h, MARGIN:MARGIN + w]


# ----------------------------------------------------------------------------
# Per-block wrappers (weight re-indexing only; no activation glue for stride-1).
# ----------------------------------------------------------------------------
def conv_block(sources, src_channels, w_oihw, gamma, beta, h, w, *, K,
               relu=True, residual=None):
    """Conv2d(K, s1, p=(K-1)//2, bias=False) + InstanceNorm2d(affine)
       (+ReLU) (+residual).  torch.cat along channels is fused (sources stay
       separate; their taps are concatenated in the slab)."""
    p = (K - 1) // 2
    cout = w_oihw.shape[0]
    c16out, hu, wpu = _canonical_spec(h, w, cout)

    segs, start = [], 0
    for cs in src_channels:
        seg = w_oihw[:, start:start + cs]                      # (cout, cs, K, K)
        seg = jnp.pad(seg, ((0, 0), (0, _rnd(cs, 16) - cs), (0, 0), (0, 0)))
        segs.append(jnp.transpose(seg, (0, 2, 3, 1)))          # (cout, K, K, cs16)
        start += cs
    wk = jnp.concatenate(segs, axis=-1)                        # (cout, K, K, ctot)
    ctot = wk.shape[-1]
    wk = jnp.pad(wk, ((0, c16out - cout), (0, 0), (0, 0), (0, 0)))
    w_flat = wk.reshape(c16out, K * K * ctot).astype(MXU_DTYPE)

    taps = tuple((MARGIN + kh - p, kw - p)
                 for kh in range(K) for kw in range(K))
    g = jnp.pad(gamma, (0, c16out - cout)).reshape(c16out, 1)
    b = jnp.pad(beta, (0, c16out - cout)).reshape(c16out, 1)
    return _fused_call(sources, w_flat, g, b, taps=taps, wp=wpu, h_span=h,
                       w_valid=w, n_rep=1, c16out=c16out, row_ofs=MARGIN,
                       out_rows=hu, relu=relu, residual=residual, count=h * w)


def downsample_block(x_can, c_in, w_oihw, gamma, beta, h, w):
    """Conv2d(4, s2, p1) + IN + ReLU as a stride-1 2x2 conv on a space-to-depth
       repack of the zero-margined input."""
    n = x_can.shape[0]
    c16in, hu_in, wpu_in = _canonical_spec(h, w, c_in)
    cout = w_oihw.shape[0]
    ho, wo = h // 2, w // 2
    c16out, hu_out, wpu_out = _canonical_spec(ho, wo, cout)

    xu = x_can.reshape(n, c16in, hu_in, wpu_in)
    win = xu[:, :, MARGIN - 1:MARGIN + 1 + h, MARGIN - 1:MARGIN + 1 + w]
    phases = [win[:, :, a::2, b::2] for a in (0, 1) for b in (0, 1)]
    s2d = jnp.concatenate(phases, axis=1)            # (n, 4*c16in, ho+1, wo+1)
    src = jnp.pad(s2d, ((0, 0), (0, 0), (0, 0),
                        (MARGIN, wpu_out - MARGIN - (wo + 1))))
    src = src.reshape(n, 4 * c16in, (ho + 1) * wpu_out)

    w6 = w_oihw.reshape(cout, c_in, 2, 2, 2, 2)      # (co, ci, di, pr, dj, pc)
    w6 = jnp.pad(w6, ((0, 0), (0, c16in - c_in), (0, 0), (0, 0), (0, 0), (0, 0)))
    wt = jnp.transpose(w6, (0, 2, 4, 3, 5, 1))       # (co, di, dj, pr, pc, ci16)
    wt = wt.reshape(cout, 4, 4 * c16in)
    wt = jnp.pad(wt, ((0, c16out - cout), (0, 0), (0, 0)))
    w_flat = wt.reshape(c16out, 16 * c16in).astype(MXU_DTYPE)

    taps = ((0, 0), (0, 1), (1, 0), (1, 1))          # (di, dj)
    g = jnp.pad(gamma, (0, c16out - cout)).reshape(c16out, 1)
    b = jnp.pad(beta, (0, c16out - cout)).reshape(c16out, 1)
    # TODO(synk): fold the space-to-depth repack into the kernel (strided lane
    #             loads) to drop this one XLA HBM round trip.
    return _fused_call([src], w_flat, g, b, taps=taps, wp=wpu_out, h_span=ho,
                       w_valid=wo, n_rep=1, c16out=c16out, row_ofs=MARGIN,
                       out_rows=hu_out, relu=True, residual=None, count=ho * wo)


def upsample_block(sources, src_channels, w_iohw, gamma, beta, h, w):
    """ConvTranspose2d(4, s2, p1) + IN + ReLU.  The 4 sub-pixel output phases
       are fused into ONE GEMM (M = 4*C16out rows over the shared 3x3 tap
       union); InstanceNorm stats span all phases."""
    n = sources[0].shape[0]
    cout = w_iohw.shape[1]
    c16out = _rnd(cout, 16)
    _, hu_in, wpu_in = _canonical_spec(h, w, src_channels[0])

    src_w, start = [], 0
    for cs in src_channels:
        ws = jnp.transpose(w_iohw[start:start + cs], (1, 0, 2, 3))  # (co, cs, 4, 4)
        ws = jnp.pad(ws, ((0, 0), (0, _rnd(cs, 16) - cs), (0, 0), (0, 0)))
        src_w.append(ws)
        start += cs

    blocks = []
    for r in range(2):
        for c in range(2):
            tap_mats = []
            for a in range(3):
                for b in range(3):
                    di, dj = a - r, b - c
                    cols = []
                    for ws in src_w:
                        if 0 <= di <= 1 and 0 <= dj <= 1:
                            cols.append(ws[:, :, 3 - r - 2 * di, 3 - c - 2 * dj])
                        else:
                            cols.append(jnp.zeros(ws.shape[:2], ws.dtype))
                    tap_mats.append(jnp.concatenate(cols, axis=1))
            wpc = jnp.stack(tap_mats, axis=1)                 # (cout, 9, ctot)
            wpc = jnp.pad(wpc, ((0, c16out - cout), (0, 0), (0, 0)))
            blocks.append(wpc.reshape(c16out, -1))
    w_flat = jnp.concatenate(blocks, axis=0).astype(MXU_DTYPE)  # (4*c16out, 9*ctot)

    taps = tuple((MARGIN - 1 + a, b - 1) for a in range(3) for b in range(3))
    g = jnp.pad(gamma, (0, c16out - cout)).reshape(c16out, 1)
    bvec = jnp.pad(beta, (0, c16out - cout)).reshape(c16out, 1)
    raw = _fused_call(sources, w_flat, g, bvec, taps=taps, wp=wpu_in, h_span=h,
                      w_valid=w, n_rep=4, c16out=c16out, row_ofs=0, out_rows=h,
                      relu=True, residual=None, count=4 * h * w)

    # Sub-pixel interleave: phase (r, c) -> out[2i+r, 2j+c], then re-embed into
    # the canonical zero-margined layout at (2h, 2w).
    # TODO(synk): move the interleave into the kernel (phase-strided stores) to
    #             drop one XLA HBM round trip at the largest resolutions.
    ph = raw.reshape(n, 2, 2, c16out, h, wpu_in)[..., MARGIN:MARGIN + w]
    up = jnp.transpose(ph, (0, 3, 4, 1, 5, 2)).reshape(n, c16out, 2 * h, 2 * w)
    c16o2, hu2, wpu2 = _canonical_spec(2 * h, 2 * w, cout)
    up = jnp.pad(up, ((0, 0), (0, c16o2 - c16out), (MARGIN, MARGIN),
                      (MARGIN, wpu2 - MARGIN - 2 * w)))
    return up.reshape(n, c16o2, hu2 * wpu2)


# ----------------------------------------------------------------------------
# Deterministic parameter construction (mirrors UNetModule.__init__).
# ----------------------------------------------------------------------------
def _conv_params(key, cout, cin, K):
    k1, k2, k3 = jax.random.split(key, 3)
    w = jax.random.normal(k1, (cout, cin, K, K), jnp.float32) \
        * jnp.sqrt(2.0 / (cin * K * K))
    gamma = 1.0 + 0.1 * jax.random.normal(k2, (cout,), jnp.float32)
    beta = 0.1 * jax.random.normal(k3, (cout,), jnp.float32)
    return {'w': w, 'gamma': gamma, 'beta': beta}


def _convt_params(key, cin, cout, K=4):
    k1, k2, k3 = jax.random.split(key, 3)
    w = jax.random.normal(k1, (cin, cout, K, K), jnp.float32) \
        * jnp.sqrt(2.0 / (cin * K * K))
    gamma = 1.0 + 0.1 * jax.random.normal(k2, (cout,), jnp.float32)
    beta = 0.1 * jax.random.normal(k3, (cout,), jnp.float32)
    return {'w': w, 'gamma': gamma, 'beta': beta}


def init_unet_params(key, image_size, image_channels, output_channels,
                     bottleneck_image_size, bottleneck_block_count):
    kit = iter(jax.random.split(key, 64))
    down, down_ch = [], {}
    down.append(('conv7', _conv_params(next(kit), output_channels,
                                       image_channels, 7)))
    down_ch[image_size] = output_channels
    cc, cs = output_channels, image_size
    while cs > bottleneck_image_size:
        down.append(('down', _conv_params(next(kit), cc * 2, cc, 4)))
        cc, cs = cc * 2, cs // 2
        down_ch[cs] = cc
    bott = []
    for _ in range(bottleneck_block_count):
        bott.append((_conv_params(next(kit), cc, cc, 3),
                     _conv_params(next(kit), cc, cc, 3)))
    up = []
    while cs < image_size:
        in_ch = cc if cs == bottleneck_image_size else cc + down_ch[cs]
        up.insert(0, ('up', _convt_params(next(kit), in_ch, cc // 2)))
        cc, cs = cc // 2, cs * 2
    up.insert(0, ('conv7', _conv_params(next(kit), output_channels,
                                        cc + output_channels, 7)))
    return down, bott, up


# ----------------------------------------------------------------------------
# Forward pass (mirrors UNetModule.forward).
# ----------------------------------------------------------------------------
def unet_forward(x_nchw, params, image_size, image_channels, output_channels):
    down, bott, up = params
    x = to_canonical(x_nchw)
    cur_c, cur_hw = image_channels, image_size

    down_outs = []
    for kind, p in down:
        if kind == 'conv7':
            x = conv_block([x], [cur_c], p['w'], p['gamma'], p['beta'],
                           cur_hw, cur_hw, K=7)
            cur_c = p['w'].shape[0]
        else:
            x = downsample_block(x, cur_c, p['w'], p['gamma'], p['beta'],
                                 cur_hw, cur_hw)
            cur_c = p['w'].shape[0]
            cur_hw //= 2
        down_outs.append((x, cur_c, cur_hw))

    for p1, p2 in bott:   # ResNetBlock: x + IN(Conv3(ReLU(IN(Conv3(x)))))
        hmid = conv_block([x], [cur_c], p1['w'], p1['gamma'], p1['beta'],
                          cur_hw, cur_hw, K=3, relu=True)
        x = conv_block([hmid], [cur_c], p2['w'], p2['gamma'], p2['beta'],
                       cur_hw, cur_hw, K=3, relu=False, residual=x)

    _, p = up[-1]
    x = upsample_block([x], [cur_c], p['w'], p['gamma'], p['beta'],
                       cur_hw, cur_hw)
    cur_c, cur_hw = p['w'].shape[1], cur_hw * 2

    for i in range(len(up) - 2, -1, -1):
        kind, p = up[i]
        skip, skip_c, _ = down_outs[i]
        srcs, src_ch = [x, skip], [cur_c, skip_c]   # fused torch.cat(dim=1)
        if kind == 'conv7':
            x = conv_block(srcs, src_ch, p['w'], p['gamma'], p['beta'],
                           cur_hw, cur_hw, K=7)
            cur_c = p['w'].shape[0]
        else:
            x = upsample_block(srcs, src_ch, p['w'], p['gamma'], p['beta'],
                               cur_hw, cur_hw)
            cur_c, cur_hw = p['w'].shape[1], cur_hw * 2

    out = from_canonical(x, output_channels, image_size, image_size)
    return out.astype(jnp.float32)


if __name__ == "__main__":
    image_size = 16
    image_channels = 4
    output_channels = 8
    bottleneck_image_size = 4
    bottleneck_block_count = 2
    batch = 2

    key = jax.random.PRNGKey(0)
    kp, kx = jax.random.split(key)
    params = init_unet_params(kp, image_size, image_channels, output_channels,
                              bottleneck_image_size, bottleneck_block_count)
    x = jax.random.normal(kx, (batch, image_channels, image_size, image_size),
                          jnp.float32)

    fwd = jax.jit(lambda inp: unet_forward(inp, params, image_size,
                                           image_channels, output_channels))
    out = jax.block_until_ready(fwd(x))

    assert out.shape == (batch, output_channels, image_size, image_size), out.shape
    assert bool(jnp.all(jnp.isfinite(out)))
    print("KERNEL_OK")
</pallas_src>

<mosaic_0001>
module attributes {stable_mosaic.version = 11 : i64} {
  func.func @k(%arg0: memref<8x128xf32, #tpu.memory_space<vmem>>, %arg1: memref<8x128xf32, #tpu.memory_space<vmem>>) attributes {dimension_semantics = [], scalar_prefetch = 0 : i64, scratch_operands = 0 : i64, tpu.core_type = #tpu.core_type<tc>} {
    %c0 = arith.constant 0 : index
    %c0_0 = arith.constant 0 : index
    %0 = vector.load %arg0[%c0, %c0_0] : memref<8x128xf32, #tpu.memory_space<vmem>>, vector<8x128xf32>
    %c1_i32 = arith.constant 1 : i32
    %1 = tpu.dynamic_rotate %0 by %c1_i32 dim 1 : vector<8x128xf32>, i32 -> vector<8x128xf32>
    %c0_1 = arith.constant 0 : index
    %c0_2 = arith.constant 0 : index
    %2 = vector.load %arg1[%c0_1, %c0_2] : memref<8x128xf32, #tpu.memory_space<vmem>>, vector<8x128xf32>
    tpu.vector_store %arg1[%c0_1, %c0_2], %1 {strides = array<i32>} : memref<8x128xf32, #tpu.memory_space<vmem>>, vector<8x128xf32>,
    return
  }
}

</mosaic_0001>

<llo_original>
// kernel: tpu_custom_call.1
$region0: #{tpu_custom_call.1}
  #allocation0 [shape = 'u32[]', space=smem, size = 0x4, offset = 0x4, fixed_abs, tag = 'smem constant byte address 0x4 - core index']
  #allocation1 [shape = 'u32[144,128]{1,0:T(1,128)}', space=vmem, size = 0x12000, scoped, tag = 'internal scratch']
  %s0 = inlined_call_operand.hbm [shape: f32[8,128], index: 0, kind: input, shape index: {}]
  %s1 = inlined_call_operand.hbm [shape: f32[8,128], index: 1, kind: output, shape index: {}]
  %s2 = sld [smem:[#allocation0]]
  $region18: #{tpu_custom_call.1} parent=0
    _
  %s4 = ssub.s32 1, %s2
  %s5 = scalar_select 0, %s4, %s2
  $region1: #{tpu_custom_call.1} parent=0
    #allocation2 [shape = 'u8[4096]{0}', space=vmem, size = 0x1000, scoped, tag = 'input window, operand 0, single buffered']
    #allocation3 [shape = 's32[1]{0}', space=sflag, size = 0x4, scoped, tag = 'scoped memory for tpu_custom_call.1']
    #allocation4 [shape = 's32[1]{0}', space=sflag, size = 0x4, scoped, tag = 'scoped memory for tpu_custom_call.1']
    #allocation5 [shape = 'u8[4096]{0}', space=vmem, size = 0x1000, scoped, tag = 'output window, operand 0, single buffered']
    %6 = vsyncpa [#allocation3], 0
    %7 = vsyncpa [#allocation4], 0
    // Predicated region
    $region2: #{tpu_custom_call.1} parent=1 // pred_check
      _
    $region3: #{tpu_custom_call.1} parent=1 // pred_check_branch
      %9 = sbr.rel (0) target = $region5
    $region4: #{tpu_custom_call.1} parent=1 // pred_region
      %s11 = ssub.s32 128, 128
      %12 = vsyncadd [#allocation3], %s11
      %s14 = sshll.u32 [#allocation2], 4
      %s15 = int_to_ptr.vmem [resolvable:$true] %s14
      %17 = dma.hbm_to_vmem [thread:$0]  %s0, 128, %s15, [#allocation3]
    $region5: #{tpu_custom_call.1} parent=1 // pred_fallthru
      _
    // Predicated region
    $region6: #{tpu_custom_call.1} parent=1 // pred_check
      _
    $region7: #{tpu_custom_call.1} parent=1 // pred_check_branch
      %19 = sbr.rel (0) target = $region9
    $region8: #{tpu_custom_call.1} parent=1 // pred_region
      %20 = dma.done [#allocation3], 128
    $region9: #{tpu_custom_call.1} parent=1 // pred_fallthru
      _
    %v21 = vld [vmem:[#allocation2] sm:$0xff]
    %22 = vrot.lane.b32.xlu0 %v21, 1
    %v23 = vpop.permute.xlu0 %22
    %24 = vst [vmem:[#allocation5] sm:$0xff] %v23
    // Predicated region
    $region10: #{tpu_custom_call.1} parent=1 // pred_check
      _
    $region11: #{tpu_custom_call.1} parent=1 // pred_check_branch
      %26 = sbr.rel (0) target = $region13
    $region12: #{tpu_custom_call.1} parent=1 // pred_region
      %s28 = ssub.s32 128, 128
      %29 = vsyncadd [#allocation4], %s28
      %s31 = sshll.u32 [#allocation5], 4
      %s32 = int_to_ptr.vmem [resolvable:$true] %s31
      %34 = dma.vmem_to_hbm [thread:$0]  %s32, 128, %s1, [#allocation4]
    $region13: #{tpu_custom_call.1} parent=1 // pred_fallthru
      _
    // Predicated region
    $region14: #{tpu_custom_call.1} parent=1 // pred_check
      _
    $region15: #{tpu_custom_call.1} parent=1 // pred_check_branch
      %36 = sbr.rel (0) target = $region17
    $region16: #{tpu_custom_call.1} parent=1 // pred_region
      %37 = dma.done [#allocation4], 128
    $region17: #{tpu_custom_call.1} parent=1 // pred_fallthru
      _
    %38 = vsyncpa [#allocation3], 1
    %39 = vsyncpa [#allocation4], 1

</llo_original>
